<compile_context>
chip_gen: v7x
topology: tpu7x:2x2x1
jax: 0.10.0
libtpu: 0.0.40
codegen_flags: <defaults>
</compile_context>

<pallas_src>
import functools

import jax
import jax.numpy as jnp
from jax.experimental import pallas as pl
from jax.experimental.pallas import tpu as pltpu


def _vmem_budget_bytes():
    # Physical VMEM minus headroom (v5e/v6e: 128 MiB, v7x: 64 MiB).
    try:
        cap = int(pltpu.get_tpu_info().vmem_capacity_bytes)
    except Exception:
        cap = 64 << 20                      # conservative (v7x-sized) fallback
    return (cap * 3) // 4


# ---------------------------------------------------------------------------
# Fused single-pass path: whole image(s) per block.
# ---------------------------------------------------------------------------
def _ca_fused_kernel(x_ref, w1t_ref, b1_ref, w2t_ref, b2_ref, o_ref):
    x = x_ref[...]                                            # (B, C, HW)
    # Global average pool; f32 accumulation (1/HW is folded into w1t).
    pooled = jnp.sum(x.astype(jnp.float32), axis=-1)          # (B, C)
    h = jnp.dot(pooled, w1t_ref[...], preferred_element_type=jnp.float32)
    h = jnp.maximum(h + b1_ref[...], 0.0)                     # (B, Crp)
    s = jnp.dot(h, w2t_ref[...], preferred_element_type=jnp.float32)
    s = jax.nn.sigmoid(s + b2_ref[...])                       # (B, C)
    # Per-channel scale in the input dtype -> no full-block f32 temp.
    o_ref[...] = (x * s.astype(x.dtype)[:, :, None]).astype(o_ref.dtype)


# ---------------------------------------------------------------------------
# Two-pass HW-tiled path (huge images): pooling + squeeze/excite, then scale.
# ---------------------------------------------------------------------------
def _ca_pool_kernel(x_ref, w1t_ref, b1_ref, w2t_ref, b2_ref, s_ref, acc_ref,
                    *, hw, hw_tile, needs_mask):
    t = pl.program_id(1)

    @pl.when(t == 0)
    def _init():
        acc_ref[...] = jnp.zeros_like(acc_ref)

    x = x_ref[...].astype(jnp.float32)                        # (1, C, hw_tile)
    if needs_mask:
        lane = jax.lax.broadcasted_iota(jnp.int32, (1, 1, hw_tile), 2)
        x = jnp.where(t * hw_tile + lane < hw, x, 0.0)
    acc_ref[...] += jnp.sum(x, axis=-1)                       # (1, C) f32

    @pl.when(t == pl.num_programs(1) - 1)
    def _finish():
        h = jnp.dot(acc_ref[...], w1t_ref[...],
                    preferred_element_type=jnp.float32)
        h = jnp.maximum(h + b1_ref[...], 0.0)
        s = jnp.dot(h, w2t_ref[...], preferred_element_type=jnp.float32)
        s = jax.nn.sigmoid(s + b2_ref[...])                   # (1, C)
        s_ref[...] = s[:, :, None]                            # (1, C, 1)


def _ca_scale_kernel(x_ref, s_ref, o_ref):
    x = x_ref[...]                                            # (1, C, hw_tile)
    o_ref[...] = (x * s_ref[...].astype(x.dtype)).astype(o_ref.dtype)


# ---------------------------------------------------------------------------
# Wrapper
# ---------------------------------------------------------------------------
def ca_layer(x_nchw, w1, b1, w2, b2, *, _force_block_budget=None):
    """Channel attention: x * sigmoid(W2 @ relu(W1 @ avgpool(x) + b1) + b2)."""
    N, C, H, W = x_nchw.shape
    Cr = w1.shape[0]
    HW = H * W
    itemsize = jnp.dtype(x_nchw.dtype).itemsize

    # (N, C, HW) view; no host-side pad or slice (free metadata reshape only).
    x_flat = x_nchw.reshape(N, C, HW)

    vmem_budget = _vmem_budget_bytes()
    block_budget = (vmem_budget // 5 if _force_block_budget is None
                    else int(_force_block_budget))

    # Lane-dense f32 parameter layouts; fold 1/HW into the first FC; pad the
    # squeezed dim to a sublane multiple (zero padding is exact: relu(0+0)=0
    # and the padded rows of w2t are zero).
    inv_hw = 1.0 / float(HW)
    w1t = jnp.asarray(w1, jnp.float32).T * inv_hw             # (C, Cr)
    w2t = jnp.asarray(w2, jnp.float32).T                      # (Cr, C)
    b1r = jnp.asarray(b1, jnp.float32).reshape(1, Cr)
    b2r = jnp.asarray(b2, jnp.float32).reshape(1, C)
    Crp = max(8, ((Cr + 7) // 8) * 8)
    if Crp != Cr:
        w1t = jnp.pad(w1t, ((0, 0), (0, Crp - Cr)))
        b1r = jnp.pad(b1r, ((0, 0), (0, Crp - Cr)))
        w2t = jnp.pad(w2t, ((0, Crp - Cr), (0, 0)))

    per_image = C * HW * itemsize

    if per_image <= block_budget:
        # ------------------ fused single-pass path ------------------
        max_imgs = max(1, min(N, block_budget // per_image))

        def steps(b):
            return -(-N // b)

        def score(b):
            st = steps(b)
            return (
                min(st, 4),                    # >=3-4 steps: full pipeline overlap
                1 if st % 2 == 0 else 0,       # even grid: both v7x TCs get work
                min(b * per_image, 2 << 20),   # >=~2 MiB blocks amortize step cost
                b,                             # then prefer bigger blocks
            )

        b_blk = max(range(1, max_imgs + 1), key=score)
        grid = (steps(b_blk),)                 # partial last block allowed
        block_bytes = b_blk * per_image
        vmem_limit = int(min(vmem_budget,
                             max(32 << 20, 6 * block_bytes + (2 << 20))))

        cost = pl.CostEstimate(
            flops=2 * N * C * HW + 4 * N * C * Crp,
            transcendentals=N * C,
            bytes_accessed=2 * N * C * HW * itemsize,
        )

        out_flat = pl.pallas_call(
            _ca_fused_kernel,
            out_shape=jax.ShapeDtypeStruct((N, C, HW), x_nchw.dtype),
            grid_spec=pltpu.PrefetchScalarGridSpec(
                num_scalar_prefetch=0,
                grid=grid,
                in_specs=[
                    pl.BlockSpec((b_blk, C, HW), lambda n: (n, 0, 0)),   # x
                    pl.BlockSpec((C, Crp), lambda n: (0, 0)),            # w1^T/HW
                    pl.BlockSpec((1, Crp), lambda n: (0, 0)),            # b1
                    pl.BlockSpec((Crp, C), lambda n: (0, 0)),            # w2^T
                    pl.BlockSpec((1, C), lambda n: (0, 0)),              # b2
                ],
                out_specs=pl.BlockSpec((b_blk, C, HW), lambda n: (n, 0, 0)),
            ),
            compiler_params=pltpu.CompilerParams(
                dimension_semantics=("parallel",),
                vmem_limit_bytes=vmem_limit,
            ),
            cost_estimate=cost,
        )(x_flat, w1t, b1r, w2t, b2r)
        return out_flat.reshape(N, C, H, W)

    # ------------------ two-pass HW-tiled path ------------------
    lanes = max(1, block_budget // (C * itemsize))
    hw_tile = max(128, (lanes // 128) * 128)
    hw_tile = min(hw_tile, ((HW + 127) // 128) * 128)
    n_t = -(-HW // hw_tile)
    needs_mask = (HW % hw_tile) != 0
    tile_bytes = C * hw_tile * itemsize
    vmem_limit = int(min(vmem_budget, max(32 << 20, 6 * tile_bytes + (2 << 20))))

    pool_kernel = functools.partial(_ca_pool_kernel, hw=HW, hw_tile=hw_tile,
                                    needs_mask=needs_mask)
    s_nc1 = pl.pallas_call(
        pool_kernel,
        out_shape=jax.ShapeDtypeStruct((N, C, 1), jnp.float32),
        grid_spec=pltpu.PrefetchScalarGridSpec(
            num_scalar_prefetch=0,
            grid=(N, n_t),                           # HW reduction axis last
            in_specs=[
                pl.BlockSpec((1, C, hw_tile), lambda n, t: (n, 0, t)),
                pl.BlockSpec((C, Crp), lambda n, t: (0, 0)),
                pl.BlockSpec((1, Crp), lambda n, t: (0, 0)),
                pl.BlockSpec((Crp, C), lambda n, t: (0, 0)),
                pl.BlockSpec((1, C), lambda n, t: (0, 0)),
            ],
            out_specs=pl.BlockSpec((1, C, 1), lambda n, t: (n, 0, 0)),
            scratch_shapes=[pltpu.VMEM((1, C), jnp.float32)],
        ),
        compiler_params=pltpu.CompilerParams(
            dimension_semantics=("parallel", "arbitrary"),
            vmem_limit_bytes=vmem_limit,
        ),
        cost_estimate=pl.CostEstimate(
            flops=N * C * HW + 4 * N * C * Crp,
            transcendentals=N * C,
            bytes_accessed=N * C * HW * itemsize,
        ),
    )(x_flat, w1t, b1r, w2t, b2r)

    out_flat = pl.pallas_call(
        _ca_scale_kernel,
        out_shape=jax.ShapeDtypeStruct((N, C, HW), x_nchw.dtype),
        grid_spec=pltpu.PrefetchScalarGridSpec(
            num_scalar_prefetch=0,
            grid=(N, n_t),
            in_specs=[
                pl.BlockSpec((1, C, hw_tile), lambda n, t: (n, 0, t)),
                pl.BlockSpec((1, C, 1), lambda n, t: (n, 0, 0)),
            ],
            out_specs=pl.BlockSpec((1, C, hw_tile), lambda n, t: (n, 0, t)),
        ),
        compiler_params=pltpu.CompilerParams(
            dimension_semantics=("parallel", "parallel"),
            vmem_limit_bytes=vmem_limit,
        ),
        cost_estimate=pl.CostEstimate(
            flops=N * C * HW,
            transcendentals=0,
            bytes_accessed=2 * N * C * HW * itemsize,
        ),
    )(x_flat, s_nc1)
    return out_flat.reshape(N, C, H, W)


def ca_layer_ref(x, w1, b1, w2, b2):
    # Pure-JAX reference of the PyTorch forward.
    pooled = jnp.mean(x, axis=(2, 3))                          # (N, C)
    h = jnp.maximum(pooled @ w1.T + b1, 0.0)                   # (N, Cr)
    s = jax.nn.sigmoid(h @ w2.T + b2)                          # (N, C)
    return x * s[:, :, None, None]


if __name__ == "__main__":
    # Small shapes consistent with CALayer(channel=64, reduction=16).
    N, C, reduction = 2, 64, 16
    Cr = C // reduction

    key = jax.random.PRNGKey(0)
    kx, k1, k2, k3, k4, kx2 = jax.random.split(key, 6)

    bound1 = 1.0 / (C ** 0.5)
    bound2 = 1.0 / (Cr ** 0.5)
    w1 = jax.random.uniform(k1, (Cr, C), jnp.float32, -bound1, bound1)
    b1 = jax.random.uniform(k2, (Cr,), jnp.float32, -bound1, bound1)
    w2 = jax.random.uniform(k3, (C, Cr), jnp.float32, -bound2, bound2)
    b2 = jax.random.uniform(k4, (C,), jnp.float32, -bound2, bound2)

    # 1) Fused path, lane-aligned spatial (16x16).
    x = jax.random.normal(kx, (N, C, 16, 16), dtype=jnp.float32)
    out = jax.block_until_ready(ca_layer(x, w1, b1, w2, b2))
    ref = ca_layer_ref(x, w1, b1, w2, b2)
    assert out.shape == x.shape
    assert jnp.allclose(out, ref, atol=1e-5, rtol=1e-5), "fused path mismatch"

    # 2) Fused path, HW not a multiple of 128 (masked tail store, no host pad).
    x2 = jax.random.normal(kx2, (N, C, 17, 17), dtype=jnp.float32)
    out2 = jax.block_until_ready(ca_layer(x2, w1, b1, w2, b2))
    ref2 = ca_layer_ref(x2, w1, b1, w2, b2)
    assert jnp.allclose(out2, ref2, atol=1e-5, rtol=1e-5), "unaligned-HW mismatch"

    # 3) Two-pass HW-tiled path (forced small block budget; this is the path
    #    huge images take on v7x's 64 MiB VMEM), including the masked tail tile.
    out3 = jax.block_until_ready(
        ca_layer(x2, w1, b1, w2, b2, _force_block_budget=32 * 1024))
    assert jnp.allclose(out3, ref2, atol=1e-5, rtol=1e-5), "two-pass path mismatch"

    print("KERNEL_OK")
</pallas_src>

<mosaic_0001>
module attributes {stable_mosaic.version = 11 : i64} {
  func.func @_ca_fused_kernel(%arg0: i32, %arg1: memref<1x64x256xf32, #tpu.memory_space<vmem>>, %arg2: memref<64x8xf32, #tpu.memory_space<vmem>>, %arg3: memref<1x8xf32, #tpu.memory_space<vmem>>, %arg4: memref<8x64xf32, #tpu.memory_space<vmem>>, %arg5: memref<1x64xf32, #tpu.memory_space<vmem>>, %arg6: memref<1x64x256xf32, #tpu.memory_space<vmem>>) attributes {dimension_semantics = [#tpu.dimension_semantics<parallel>], iteration_bounds = array<i64: 2>, scalar_prefetch = 0 : i64, scratch_operands = 0 : i64, tpu.core_type = #tpu.core_type<tc>, window_params = [{transform_indices = @transform_0, window_bounds = array<i64: 1, 64, 256>}, {pipeline_mode = #tpu.pipeline_mode<synchronous>, transform_indices = @transform_1, window_bounds = array<i64: 64, 8>}, {pipeline_mode = #tpu.pipeline_mode<synchronous>, transform_indices = @transform_2, window_bounds = array<i64: 1, 8>}, {pipeline_mode = #tpu.pipeline_mode<synchronous>, transform_indices = @transform_3, window_bounds = array<i64: 8, 64>}, {pipeline_mode = #tpu.pipeline_mode<synchronous>, transform_indices = @transform_4, window_bounds = array<i64: 1, 64>}, {transform_indices = @transform_5, window_bounds = array<i64: 1, 64, 256>}]} {
    %c0 = arith.constant 0 : index
    %c0_0 = arith.constant 0 : index
    %c0_1 = arith.constant 0 : index
    %0 = vector.load %arg1[%c0, %c0_0, %c0_1] : memref<1x64x256xf32, #tpu.memory_space<vmem>>, vector<1x64x256xf32>
    %cst = arith.constant dense<0.000000e+00> : vector<1x64xf32>
    %1 = vector.multi_reduction <add>, %0, %cst [2] : vector<1x64x256xf32> to vector<1x64xf32>
    %c0_2 = arith.constant 0 : index
    %c0_3 = arith.constant 0 : index
    %2 = vector.load %arg2[%c0_2, %c0_3] : memref<64x8xf32, #tpu.memory_space<vmem>>, vector<64x8xf32>
    %cst_4 = arith.constant dense<0.000000e+00> : vector<1x8xf32>
    %3 = tpu.matmul %1, %2, %cst_4 {dimension_numbers = #tpu.dot_dimension_numbers<[1], [0], [0], [1], [0, 0, 1, 1], [], []>} : vector<1x64xf32>, vector<64x8xf32>, vector<1x8xf32> -> vector<1x8xf32>
    %c0_5 = arith.constant 0 : index
    %c0_6 = arith.constant 0 : index
    %4 = vector.load %arg3[%c0_5, %c0_6] : memref<1x8xf32, #tpu.memory_space<vmem>>, vector<1x8xf32>
    %5 = arith.addf %3, %4 : vector<1x8xf32>
    %cst_7 = arith.constant 0.000000e+00 : f32
    %6 = vector.broadcast %cst_7 : f32 to vector<1x8xf32>
    %7 = arith.maximumf %5, %6 : vector<1x8xf32>
    %c0_8 = arith.constant 0 : index
    %c0_9 = arith.constant 0 : index
    %8 = vector.load %arg4[%c0_8, %c0_9] : memref<8x64xf32, #tpu.memory_space<vmem>>, vector<8x64xf32>
    %cst_10 = arith.constant dense<0.000000e+00> : vector<1x64xf32>
    %9 = tpu.matmul %7, %8, %cst_10 {dimension_numbers = #tpu.dot_dimension_numbers<[1], [0], [0], [1], [0, 0, 1, 1], [], []>} : vector<1x8xf32>, vector<8x64xf32>, vector<1x64xf32> -> vector<1x64xf32>
    %c0_11 = arith.constant 0 : index
    %c0_12 = arith.constant 0 : index
    %10 = vector.load %arg5[%c0_11, %c0_12] : memref<1x64xf32, #tpu.memory_space<vmem>>, vector<1x64xf32>
    %11 = arith.addf %9, %10 : vector<1x64xf32>
    %12 = arith.negf %11 : vector<1x64xf32>
    %13 = math.exp %12 : vector<1x64xf32>
    %cst_13 = arith.constant 1.000000e+00 : f32
    %14 = vector.broadcast %cst_13 : f32 to vector<1x64xf32>
    %15 = arith.addf %14, %13 : vector<1x64xf32>
    %16 = arith.divf %14, %15 : vector<1x64xf32>
    %17 = vector.shape_cast %16 : vector<1x64xf32> to vector<1x64x1xf32>
    %18 = vector.broadcast %17 : vector<1x64x1xf32> to vector<1x64x256xf32>
    %19 = arith.mulf %0, %18 : vector<1x64x256xf32>
    %c0_14 = arith.constant 0 : index
    %c0_15 = arith.constant 0 : index
    %c0_16 = arith.constant 0 : index
    %20 = vector.load %arg6[%c0_14, %c0_15, %c0_16] : memref<1x64x256xf32, #tpu.memory_space<vmem>>, vector<1x64x256xf32>
    tpu.vector_store %arg6[%c0_14, %c0_15, %c0_16], %19 {strides = array<i32>} : memref<1x64x256xf32, #tpu.memory_space<vmem>>, vector<1x64x256xf32>,
    return
  }
  func.func @transform_0(%arg0: i32) -> (i32, i32, i32) {
    %c0_i32 = arith.constant 0 : i32
    %c0_i32_0 = arith.constant 0 : i32
    %c0_i32_1 = arith.constant 0 : i32
    return %arg0, %c0_i32, %c0_i32_0 : i32, i32, i32
  }
  func.func @transform_1(%arg0: i32) -> (i32, i32) {
    %c0_i32 = arith.constant 0 : i32
    %c0_i32_0 = arith.constant 0 : i32
    %c0_i32_1 = arith.constant 0 : i32
    return %c0_i32, %c0_i32_0 : i32, i32
  }
  func.func @transform_2(%arg0: i32) -> (i32, i32) {
    %c0_i32 = arith.constant 0 : i32
    %c0_i32_0 = arith.constant 0 : i32
    %c0_i32_1 = arith.constant 0 : i32
    return %c0_i32, %c0_i32_0 : i32, i32
  }
  func.func @transform_3(%arg0: i32) -> (i32, i32) {
    %c0_i32 = arith.constant 0 : i32
    %c0_i32_0 = arith.constant 0 : i32
    %c0_i32_1 = arith.constant 0 : i32
    return %c0_i32, %c0_i32_0 : i32, i32
  }
  func.func @transform_4(%arg0: i32) -> (i32, i32) {
    %c0_i32 = arith.constant 0 : i32
    %c0_i32_0 = arith.constant 0 : i32
    %c0_i32_1 = arith.constant 0 : i32
    return %c0_i32, %c0_i32_0 : i32, i32
  }
  func.func @transform_5(%arg0: i32) -> (i32, i32, i32) {
    %c0_i32 = arith.constant 0 : i32
    %c0_i32_0 = arith.constant 0 : i32
    %c0_i32_1 = arith.constant 0 : i32
    return %arg0, %c0_i32, %c0_i32_0 : i32, i32, i32
  }
}

</mosaic_0001>

<llo_original>
// kernel: tpu_custom_call.1
$region0: #{tpu_custom_call.1}
  #allocation0 [shape = 'u32[]', space=smem, size = 0x4, offset = 0x4, fixed_abs, tag = 'smem constant byte address 0x4 - core index']
  #allocation1 [shape = 'u32[144,128]{1,0:T(1,128)}', space=vmem, size = 0x12000, scoped, tag = 'internal scratch']
  %s0 = inlined_call_operand.hbm [shape: f32[2,64,256], index: 0, kind: input, shape index: {}]
  %s1 = inlined_call_operand.vmem [shape: f32[64,8], index: 1, kind: input, shape index: {}]
  %s2 = inlined_call_operand.vmem [shape: f32[1,8], index: 2, kind: input, shape index: {}]
  %s3 = inlined_call_operand.vmem [shape: f32[8,64], index: 3, kind: input, shape index: {}]
  %s4 = inlined_call_operand.vmem [shape: f32[1,64], index: 4, kind: input, shape index: {}]
  %s5 = inlined_call_operand.hbm [shape: f32[2,64,256], index: 5, kind: output, shape index: {}]
  %s6 = sld [smem:[#allocation0]]
  $region57: #{tpu_custom_call.1} parent=0
    _
  %s8 = ssub.s32 1, %s6
  %s9 = scalar_select 0, %s8, %s6
  $region1: #{tpu_custom_call.1} parent=0
    #allocation2 [shape = 'u8[131072]{0}', space=vmem, size = 0x20000, scoped, tag = 'input window, operand 0']
    #allocation3 [shape = 's32[2]{0}', space=sflag, size = 0x8, scoped, tag = 'scoped memory for tpu_custom_call.1']
    #allocation4 [shape = 's32[2]{0}', space=sflag, size = 0x8, scoped, tag = 'scoped memory for tpu_custom_call.1']
    #allocation5 [shape = 'u8[131072]{0}', space=vmem, size = 0x20000, scoped, tag = 'output window, operand 0']
    %10 = vsyncpa [#allocation3], 0
    %s11 = scalar_lea.sflag [#allocation3], 1
    %12 = vsyncpa %s11, 0
    %13 = vsyncpa [#allocation4], 0
    %s14 = scalar_lea.sflag [#allocation4], 1
    %15 = vsyncpa %s14, 0
    loop: start=0, step=1, limit=4
    $region2: #{tpu_custom_call.1} parent=1 // loop_pre_header
      _
    $region3: #{tpu_custom_call.1} parent=1 // loop_header
      %s17 = sphi 0, %s21
      %p18 = scmp.ge.s32.totalorder %s17, 4
      %s27 = sphi 0, %s29
      %s30 = sphi 0, %s27
      %s31 = sphi 0, %s30
      %s47 = sphi 0, %s31
      %s51 = sphi 0, %s51
      %s53 = sphi 0, %s51
      %s54 = sphi 0, %s53
      %s68 = sphi 0, %s54
      %s72 = sphi 0, %s72
      %s74 = sphi 0, %s72
      %s75 = sphi 0, %s74
      %s89 = sphi 0, %s75
      %s93 = sphi 0, %s93
      %s95 = sphi 0, %s93
      %s96 = sphi 0, %s95
      %s110 = sphi 0, %s96
      %s114 = sphi 0, %s114
      %s116 = sphi 0, %s114
      %s117 = sphi 0, %s116
      %s131 = sphi 0, %s117
      %s137 = sphi 0, %s139
      %s140 = sphi 0, %s137
      %s141 = sphi 0, %s140
      %s157 = sphi 0, %s141
    $region4: #{tpu_custom_call.1} parent=1 // loop_header_branch
      %20 = sbr.rel (%p18) target = $region8
    $region5: #{tpu_custom_call.1} parent=1 // loop_body
      %s22 = ssub.s32 %s17, 1
      %s23 = ssub.s32 %s17, 2
      %s24 = sadd.s32 %s17, 1
      %s25 = ssub.s32 %s17, %s24
      %p26 = scmp.eq.s32.totalorder %s25, 0
      %s28 = sadd.s32 %s27, 1
      %s29 = scalar_select %p26, %s27, %s28
      %p32 = pneg %p26
      %p33 = scmp.eq.s32.totalorder %s17, 1
      %p34 = por %p32, %p33
      %p35 = scmp.ne.s32.totalorder %s27, %s30
      %p36 = scmp.eq.s32.totalorder %s17, 0
      %p37 = por %p35, %p36
      %p38 = scmp.ne.s32.totalorder %s27, %s30
      %p39 = scmp.eq.s32.totalorder %s22, 1
      %p40 = por %p38, %p39
      %p41 = scmp.ne.s32.totalorder %s30, %s31
      %p42 = scmp.eq.s32.totalorder %s22, 0
      %p43 = por %p41, %p42
      %p44 = scmp.ne.s32.totalorder %s30, %s31
      %p45 = scmp.eq.s32.totalorder %s23, 1
      %p46 = por %p44, %p45
      %p48 = scmp.ne.s32.totalorder %s31, %s47
      %p49 = scmp.eq.s32.totalorder %s23, 0
      %p50 = por %p48, %p49
      %s52 = sadd.s32 %s51, 1
      %p55 = scmp.eq.s32.totalorder %s17, 1
      %p56 = scmp.ne.s32.totalorder %s51, %s53
      %p57 = scmp.eq.s32.totalorder %s17, 0
      %p58 = por %p56, %p57
      %p59 = scmp.ne.s32.totalorder %s51, %s53
      %p60 = scmp.eq.s32.totalorder %s22, 1
      %p61 = por %p59, %p60
      %p62 = scmp.ne.s32.totalorder %s53, %s54
      %p63 = scmp.eq.s32.totalorder %s22, 0
      %p64 = por %p62, %p63
      %p65 = scmp.ne.s32.totalorder %s53, %s54
      %p66 = scmp.eq.s32.totalorder %s23, 1
      %p67 = por %p65, %p66
      %p69 = scmp.ne.s32.totalorder %s54, %s68
      %p70 = scmp.eq.s32.totalorder %s23, 0
      %p71 = por %p69, %p70
      %s73 = sadd.s32 %s72, 1
      %p76 = scmp.eq.s32.totalorder %s17, 1
      %p77 = scmp.ne.s32.totalorder %s72, %s74
      %p78 = scmp.eq.s32.totalorder %s17, 0
      %p79 = por %p77, %p78
      %p80 = scmp.ne.s32.totalorder %s72, %s74
      %p81 = scmp.eq.s32.totalorder %s22, 1
      %p82 = por %p80, %p81
      %p83 = scmp.ne.s32.totalorder %s74, %s75
      %p84 = scmp.eq.s32.totalorder %s22, 0
      %p85 = por %p83, %p84
      %p86 = scmp.ne.s32.totalorder %s74, %s75
      %p87 = scmp.eq.s32.totalorder %s23, 1
      %p88 = por %p86, %p87
      %p90 = scmp.ne.s32.totalorder %s75, %s89
      %p91 = scmp.eq.s32.totalorder %s23, 0
      %p92 = por %p90, %p91
      %s94 = sadd.s32 %s93, 1
      %p97 = scmp.eq.s32.totalorder %s17, 1
      %p98 = scmp.ne.s32.totalorder %s93, %s95
      %p99 = scmp.eq.s32.totalorder %s17, 0
      %p100 = por %p98, %p99
      %p101 = scmp.ne.s32.totalorder %s93, %s95
      %p102 = scmp.eq.s32.totalorder %s22, 1
      %p103 = por %p101, %p102
      %p104 = scmp.ne.s32.totalorder %s95, %s96
      %p105 = scmp.eq.s32.totalorder %s22, 0
      %p106 = por %p104, %p105
      %p107 = scmp.ne.s32.totalorder %s95, %s96
      %p108 = scmp.eq.s32.totalorder %s23, 1
      %p109 = por %p107, %p108
      %p111 = scmp.ne.s32.totalorder %s96, %s110
      %p112 = scmp.eq.s32.totalorder %s23, 0
      %p113 = por %p111, %p112
      %s115 = sadd.s32 %s114, 1
      %p118 = scmp.eq.s32.totalorder %s17, 1
      %p119 = scmp.ne.s32.totalorder %s114, %s116
      %p120 = scmp.eq.s32.totalorder %s17, 0
      %p121 = por %p119, %p120
      %p122 = scmp.ne.s32.totalorder %s114, %s116
      %p123 = scmp.eq.s32.totalorder %s22, 1
      %p124 = por %p122, %p123
      %p125 = scmp.ne.s32.totalorder %s116, %s117
      %p126 = scmp.eq.s32.totalorder %s22, 0
      %p127 = por %p125, %p126
      %p128 = scmp.ne.s32.totalorder %s116, %s117
      %p129 = scmp.eq.s32.totalorder %s23, 1
      %p130 = por %p128, %p129
      %p132 = scmp.ne.s32.totalorder %s117, %s131
      %p133 = scmp.eq.s32.totalorder %s23, 0
      %p134 = por %p132, %p133
      %s135 = ssub.s32 %s17, %s24
      %p136 = scmp.eq.s32.totalorder %s135, 0
      %s138 = sadd.s32 %s137, 1
      %s139 = scalar_select %p136, %s137, %s138
      %p142 = pneg %p136
      %p143 = scmp.eq.s32.totalorder %s17, 1
      %p144 = por %p142, %p143
      %p145 = scmp.ne.s32.totalorder %s137, %s140
      %p146 = scmp.eq.s32.totalorder %s17, 0
      %p147 = por %p145, %p146
      %p148 = scmp.ne.s32.totalorder %s137, %s140
      %p149 = scmp.eq.s32.totalorder %s22, 1
      %p150 = por %p148, %p149
      %p151 = scmp.ne.s32.totalorder %s140, %s141
      %p152 = scmp.eq.s32.totalorder %s22, 0
      %p153 = por %p151, %p152
      %p154 = scmp.ne.s32.totalorder %s140, %s141
      %p155 = scmp.eq.s32.totalorder %s23, 1
      %p156 = por %p154, %p155
      %p158 = scmp.ne.s32.totalorder %s141, %s157
      %p159 = scmp.eq.s32.totalorder %s23, 0
      %p160 = por %p158, %p159
      %p161 = scmp.le.s32.totalorder 1, %s17
      %p162 = scmp.lt.s32.totalorder %s17, 3
      %p163 = pnand %p161, %p162
      %p164 = pneg %p163
      // Predicated region
      $region9: #{tpu_custom_call.1} parent=5 // pred_check
        _
      $region10: #{tpu_custom_call.1} parent=5 // pred_check_branch
        %166 = sbr.rel (%p163) target = $region12
      $region11: #{tpu_custom_call.1} parent=5 // pred_region
        %s167 = ssub.s32 %s17, 1
        // Predicated region
        $region13: #{tpu_custom_call.1} parent=11 // pred_check
          %p168 = pneg %p64
        $region14: #{tpu_custom_call.1} parent=11 // pred_check_branch
          %170 = sbr.rel (%p168) target = $region16
        $region15: #{tpu_custom_call.1} parent=11 // pred_region
          _
        $region16: #{tpu_custom_call.1} parent=11 // pred_fallthru
          _
        // Predicated region
        $region17: #{tpu_custom_call.1} parent=11 // pred_check
          %p171 = pneg %p85
        $region18: #{tpu_custom_call.1} parent=11 // pred_check_branch
          %173 = sbr.rel (%p171) target = $region20
        $region19: #{tpu_custom_call.1} parent=11 // pred_region
          _
        $region20: #{tpu_custom_call.1} parent=11 // pred_fallthru
          _
        // Predicated region
        $region21: #{tpu_custom_call.1} parent=11 // pred_check
          %p174 = pneg %p106
        $region22: #{tpu_custom_call.1} parent=11 // pred_check_branch
          %176 = sbr.rel (%p174) target = $region24
        $region23: #{tpu_custom_call.1} parent=11 // pred_region
          _
        $region24: #{tpu_custom_call.1} parent=11 // pred_fallthru
          _
        // Predicated region
        $region25: #{tpu_custom_call.1} parent=11 // pred_check
          %p177 = pneg %p127
        $region26: #{tpu_custom_call.1} parent=11 // pred_check_branch
          %179 = sbr.rel (%p177) target = $region28
        $region27: #{tpu_custom_call.1} parent=11 // pred_region
          _
        $region28: #{tpu_custom_call.1} parent=11 // pred_fallthru
          _
      $region12: #{tpu_custom_call.1} parent=5 // pred_fallthru
        _
      %p180 = scmp.lt.s32.totalorder %s17, 2
      // Predicated region
      $region29: #{tpu_custom_call.1} parent=5 // pred_check
        %p181 = pneg %p180
      $region30: #{tpu_custom_call.1} parent=5 // pred_check_branch
        %183 = sbr.rel (%p181) target = $region32
      $region31: #{tpu_custom_call.1} parent=5 // pred_region
        // Predicated region
        $region33: #{tpu_custom_call.1} parent=31 // pred_check
          %p184 = pneg %p37
        $region34: #{tpu_custom_call.1} parent=31 // pred_check_branch
          %186 = sbr.rel (%p184) target = $region36
        $region35: #{tpu_custom_call.1} parent=31 // pred_region
          %s187 = sand.u32 %s27, 1
          %s188 = scalar_lea.sflag [#allocation3], %s187
          %s189 = sand.u32 %s27, 1
          %s190 = smul.addr %s189, 128
          %s191 = scalar_lea.vmem [#allocation2], %s190
          %s193 = ssub.s32 2048, 2048
          %194 = vsyncadd %s188, %s193
          %s195 = smul.addr %s17, 16
          %s196 = smul.addr %s195, 128
          %s197 = scalar_lea.hbm %s0, %s196
          %s198 = sshll.u32 %s191, 4
          %s199 = int_to_ptr.vmem [resolvable:$true] %s198
          %204 = dma.hbm_to_vmem [thread:$0]  %s197, 2048, %s199, %s188, 256, 256, 16
        $region36: #{tpu_custom_call.1} parent=31 // pred_fallthru
          _
      $region32: #{tpu_custom_call.1} parent=5 // pred_fallthru
        _
      %p205 = scmp.le.s32.totalorder 1, %s17
      %p206 = scmp.lt.s32.totalorder %s17, 3
      %p207 = pnand %p205, %p206
      %p208 = pneg %p207
      // Predicated region
      $region37: #{tpu_custom_call.1} parent=5 // pred_check
        _
      $region38: #{tpu_custom_call.1} parent=5 // pred_check_branch
        %210 = sbr.rel (%p207) target = $region40
      $region39: #{tpu_custom_call.1} parent=5 // pred_region
        %s211 = ssub.s32 %s17, 1
        %s212 = sand.u32 %s30, 1
        %s213 = scalar_lea.sflag [#allocation3], %s212
        %s214 = sand.u32 %s30, 1
        %s215 = smul.addr %s214, 128
        %s216 = scalar_lea.vmem [#allocation2], %s215
        // Predicated region
        $region41: #{tpu_custom_call.1} parent=39 // pred_check
          %p217 = pneg %p43
        $region42: #{tpu_custom_call.1} parent=39 // pred_check_branch
          %219 = sbr.rel (%p217) target = $region44
        $region43: #{tpu_custom_call.1} parent=39 // pred_region
          %220 = dma.done %s213, 2048
        $region44: #{tpu_custom_call.1} parent=39 // pred_fallthru
          _
        %s221 = sand.u32 %s30, 1
        %s222 = scalar_lea.sflag [#allocation3], %s221
        %s223 = sand.u32 %s30, 1
        %s224 = smul.addr %s223, 128
        %s225 = scalar_lea.vmem [#allocation2], %s224
        %p226 = pneg %p43
        %p227 = pneg %p40
        %p228 = pneg %p64
        %p229 = pneg %p61
        %p230 = pneg %p85
        %p231 = pneg %p82
        %p232 = pneg %p106
        %p233 = pneg %p103
        %p234 = pneg %p127
        %p235 = pneg %p124
        %p236 = pneg %p153
        %p237 = pneg %p150
        %s238 = sand.u32 %s140, 1
        %s239 = scalar_lea.sflag [#allocation4], %s238
        %s240 = sand.u32 %s140, 1
        %s241 = smul.addr %s240, 128
        %s242 = scalar_lea.vmem [#allocation5], %s241
        %v243 = vld [vmem:[%s216] sm:$0xff]
        %v244 = vld [vmem:[%s216 + $0x8] sm:$0xff]
        %v245 = vld [vmem:[%s216 + $0x10] sm:$0xff]
        %v246 = vld [vmem:[%s216 + $0x18] sm:$0xff]
        %v247 = vld [vmem:[%s216 + $0x20] sm:$0xff]
        %v248 = vld [vmem:[%s216 + $0x28] sm:$0xff]
        %v249 = vld [vmem:[%s216 + $0x30] sm:$0xff]
        %v250 = vld [vmem:[%s216 + $0x38] sm:$0xff]
        %v251 = vld [vmem:[%s216 + $0x40] sm:$0xff]
        %v252 = vld [vmem:[%s216 + $0x48] sm:$0xff]
        %v253 = vld [vmem:[%s216 + $0x50] sm:$0xff]
        %v254 = vld [vmem:[%s216 + $0x58] sm:$0xff]
        %v255 = vld [vmem:[%s216 + $0x60] sm:$0xff]
        %v256 = vld [vmem:[%s216 + $0x68] sm:$0xff]
        %v257 = vld [vmem:[%s216 + $0x70] sm:$0xff]
        %v258 = vld [vmem:[%s216 + $0x78] sm:$0xff]
        %v259 = vadd.f32 %v243, %v244
        %260 = vadd.xlane.f32.xlu0 %v259
        %v261 = vpop.xlane.xlu0 %260
        %v262 = vadd.f32 %v245, %v246
        %263 = vadd.xlane.f32.xlu0 %v262
        %v264 = vpop.xlane.xlu0 %263
        %v265 = vadd.f32 %v247, %v248
        %266 = vadd.xlane.f32.xlu0 %v265
        %v267 = vpop.xlane.xlu0 %266
        %v268 = vadd.f32 %v249, %v250
        %269 = vadd.xlane.f32.xlu0 %v268
        %v270 = vpop.xlane.xlu0 %269
        %v271 = vadd.f32 %v251, %v252
        %272 = vadd.xlane.f32.xlu0 %v271
        %v273 = vpop.xlane.xlu0 %272
        %v274 = vadd.f32 %v253, %v254
        %275 = vadd.xlane.f32.xlu0 %v274
        %v276 = vpop.xlane.xlu0 %275
        %v277 = vadd.f32 %v255, %v256
        %278 = vadd.xlane.f32.xlu0 %v277
        %v279 = vpop.xlane.xlu0 %278
        %v280 = vadd.f32 %v257, %v258
        %281 = vadd.xlane.f32.xlu0 %v280
        %v282 = vpop.xlane.xlu0 %281
        %v283 = vld [vmem:[%s1] sm:$0xff]
        %v284 = vld [vmem:[%s1 + $0x8] sm:$0xff]
        %v285 = vld [vmem:[%s1 + $0x10] sm:$0xff]
        %v286 = vld [vmem:[%s1 + $0x18] sm:$0xff]
        %v287 = vld [vmem:[%s1 + $0x20] sm:$0xff]
        %v288 = vld [vmem:[%s1 + $0x28] sm:$0xff]
        %v289 = vld [vmem:[%s1 + $0x30] sm:$0xff]
        %v290 = vld [vmem:[%s1 + $0x38] sm:$0xff]
        %v291 = vld [vmem:[%s2] sm:$0x1]
        %v300 = vlaneseq
        %v301 = vand.u32 %v300, 127
        %v302 = vlaneseq
        %v303 = vshrl.u32 %v302, 7
        %v304 = vsub.s32 %v301, %v303
        %v305 = vrot.slane %v261, %v304
        %v306 = vadd.s32 %v301, 4294967288
        %v307 = vlaneseq
        %v308 = vshrl.u32 %v307, 7
        %v309 = vsub.s32 %v306, %v308
        %v310 = vrot.slane %v264, %v309
        %vm311 = vcmask 130112
        %v312 = vsel %vm311, %v310, %v305
        %v313 = vadd.s32 %v301, 4294967280
        %v314 = vlaneseq
        %v315 = vshrl.u32 %v314, 7
        %v316 = vsub.s32 %v313, %v315
        %v317 = vrot.slane %v267, %v316
        %vm318 = vcmask 195712
        %v319 = vsel %vm318, %v317, %v312
        %v320 = vadd.s32 %v301, 4294967272
        %v321 = vlaneseq
        %v322 = vshrl.u32 %v321, 7
        %v323 = vsub.s32 %v320, %v322
        %v324 = vrot.slane %v270, %v323
        %vm325 = vcmask 261312
        %v326 = vsel %vm325, %v324, %v319
        %v327 = vadd.s32 %v301, 4294967264
        %v328 = vlaneseq
        %v329 = vshrl.u32 %v328, 7
        %v330 = vsub.s32 %v327, %v329
        %v331 = vrot.slane %v273, %v330
        %vm332 = vcmask 326912
        %v333 = vsel %vm332, %v331, %v326
        %v334 = vadd.s32 %v301, 4294967256
        %v335 = vlaneseq
        %v336 = vshrl.u32 %v335, 7
        %v337 = vsub.s32 %v334, %v336
        %v338 = vrot.slane %v276, %v337
        %vm339 = vcmask 392512
        %v340 = vsel %vm339, %v338, %v333
        %v341 = vadd.s32 %v301, 4294967248
        %v342 = vlaneseq
        %v343 = vshrl.u32 %v342, 7
        %v344 = vsub.s32 %v341, %v343
        %v345 = vrot.slane %v279, %v344
        %vm346 = vcmask 458112
        %v347 = vsel %vm346, %v345, %v340
        %v348 = vadd.s32 %v301, 4294967240
        %v349 = vlaneseq
        %v350 = vshrl.u32 %v349, 7
        %v351 = vsub.s32 %v348, %v350
        %v352 = vrot.slane %v282, %v351
        %vm353 = vcmask 523712
        %v354 = vsel %vm353, %v352, %v347
        %vm355 = vcmask 523264
        %v356 = vsel %vm355, %v354, 0
        %358 = vmatprep.subr.mxu0 0.0
        %359 = vmatpush1.msra.mxu0 %v283
        %360 = vmatprep.subr.mxu0 0.0
        %361 = vmatpush1.msra.mxu0 %v284
        %362 = vmatprep.subr.mxu0 0.0
        %363 = vmatpush1.msra.mxu0 %v285
        %364 = vmatprep.subr.mxu0 0.0
        %365 = vmatpush1.msra.mxu0 %v286
        %366 = vmatprep.subr.mxu0 0.0
        %367 = vmatpush1.msra.mxu0 %v287
        %368 = vmatprep.subr.mxu0 0.0
        %369 = vmatpush1.msra.mxu0 %v288
        %370 = vmatprep.subr.mxu0 0.0
        %371 = vmatpush1.msra.mxu0 %v289
        %372 = vmatprep.subr.mxu0 0.0
        %373 = vmatpush1.msra.mxu0 %v290
        %374 = vmatprep.subr.mxu0 0.0
        %375 = vmatpush1.msra.mxu0 0.0
        %376 = vmatprep.subr.mxu0 0.0
        %377 = vmatpush1.msra.mxu0 0.0
        %378 = vmatprep.subr.mxu0 0.0
        %379 = vmatpush1.msra.mxu0 0.0
        %380 = vmatprep.subr.mxu0 0.0
        %381 = vmatpush1.msra.mxu0 0.0
        %382 = vmatprep.subr.mxu0 0.0
        %383 = vmatpush1.msra.mxu0 0.0
        %384 = vmatprep.subr.mxu0 0.0
        %385 = vmatpush1.msra.mxu0 0.0
        %386 = vmatprep.subr.mxu0 0.0
        %387 = vmatpush1.msra.mxu0 0.0
        %388 = vmatprep.subr.mxu0 0.0
        %389 = vmatpush1.msra.mxu0 0.0
        %390 = vmatprep.subr.mxu0 0.0
        %391 = vmatpush1.msra.mxu0 0.0
        %392 = vmatprep.subr.mxu0 0.0
        %393 = vmatpush1.msra.mxu0 0.0
        %394 = vmatprep.subr.mxu0 0.0
        %395 = vmatpush1.msra.mxu0 0.0
        %396 = vmatprep.subr.mxu0 0.0
        %397 = vmatpush1.msra.mxu0 0.0
        %398 = vmatprep.subr.mxu0 0.0
        %399 = vmatpush1.msra.mxu0 0.0
        %400 = vmatprep.subr.mxu0 0.0
        %401 = vmatpush1.msra.mxu0 0.0
        %402 = vmatprep.subr.mxu0 0.0
        %403 = vmatpush1.msra.mxu0 0.0
        %404 = vmatprep.subr.mxu0 0.0
        %405 = vmatpush1.msra.mxu0 0.0
        %406 = vmatprep.subr.mxu0 0.0
        %407 = vmatpush1.msra.mxu0 0.0
        %408 = vmatprep.subr.mxu0 0.0
        %409 = vmatpush1.msra.mxu0 0.0
        %410 = vmatprep.subr.mxu0 0.0
        %411 = vmatpush1.msra.mxu0 0.0
        %412 = vmatprep.subr.mxu0 0.0
        %413 = vmatpush1.msra.mxu0 0.0
        %414 = vmatprep.subr.mxu0 0.0
        %415 = vmatpush1.msra.mxu0 0.0
        %416 = vmatprep.subr.mxu0 0.0
        %417 = vmatpush1.msra.mxu0 0.0
        %418 = vmatprep.subr.mxu0 0.0
        %419 = vmatpush1.msra.mxu0 0.0
        %420 = vmatprep.subr.mxu0 0.0
        %421 = vmatpush1.msra.mxu0 0.0
        %422 = vmatprep.mubr.f32.mxu0 0.0
        %423 = vmatmul.mubr.f32.gmra.mrb[0].mxu0 %v356
        %v424 = vpop.f32.mrb[0].mxu0
        %v425 = vadd.f32 %v291, %v424
        %v426 = vpop.f32.mrb[0].mxu0
        %427 = vdwg.mxu0
        %v428 = vmax.f32 %v425, 0.0
        %v429 = vld [vmem:[%s3] sm:$0xff]
        %v430 = vld [vmem:[%s4] sm:$0x1]
        %vm431 = vcmask 64512
        %v433 = vsel %vm431, %v428, 0
        %435 = vmatprep.subr.mxu0 0.0
        %436 = vmatpush1.msra.mxu0 %v429
        %437 = vmatprep.subr.mxu0 0.0
        %438 = vmatpush1.msra.mxu0 0.0
        %439 = vmatprep.subr.mxu0 0.0
        %440 = vmatpush1.msra.mxu0 0.0
        %441 = vmatprep.subr.mxu0 0.0
        %442 = vmatpush1.msra.mxu0 0.0
        %443 = vmatprep.subr.mxu0 0.0
        %444 = vmatpush1.msra.mxu0 0.0
        %445 = vmatprep.subr.mxu0 0.0
        %446 = vmatpush1.msra.mxu0 0.0
        %447 = vmatprep.subr.mxu0 0.0
        %448 = vmatpush1.msra.mxu0 0.0
        %449 = vmatprep.subr.mxu0 0.0
        %450 = vmatpush1.msra.mxu0 0.0
        %451 = vmatprep.subr.mxu0 0.0
        %452 = vmatpush1.msra.mxu0 0.0
        %453 = vmatprep.subr.mxu0 0.0
        %454 = vmatpush1.msra.mxu0 0.0
        %455 = vmatprep.subr.mxu0 0.0
        %456 = vmatpush1.msra.mxu0 0.0
        %457 = vmatprep.subr.mxu0 0.0
        %458 = vmatpush1.msra.mxu0 0.0
        %459 = vmatprep.subr.mxu0 0.0
        %460 = vmatpush1.msra.mxu0 0.0
        %461 = vmatprep.subr.mxu0 0.0
        %462 = vmatpush1.msra.mxu0 0.0
        %463 = vmatprep.subr.mxu0 0.0
        %464 = vmatpush1.msra.mxu0 0.0
        %465 = vmatprep.subr.mxu0 0.0
        %466 = vmatpush1.msra.mxu0 0.0
        %467 = vmatprep.subr.mxu0 0.0
        %468 = vmatpush1.msra.mxu0 0.0
        %469 = vmatprep.subr.mxu0 0.0
        %470 = vmatpush1.msra.mxu0 0.0
        %471 = vmatprep.subr.mxu0 0.0
        %472 = vmatpush1.msra.mxu0 0.0
        %473 = vmatprep.subr.mxu0 0.0
        %474 = vmatpush1.msra.mxu0 0.0
        %475 = vmatprep.subr.mxu0 0.0
        %476 = vmatpush1.msra.mxu0 0.0
        %477 = vmatprep.subr.mxu0 0.0
        %478 = vmatpush1.msra.mxu0 0.0
        %479 = vmatprep.subr.mxu0 0.0
        %480 = vmatpush1.msra.mxu0 0.0
        %481 = vmatprep.subr.mxu0 0.0
        %482 = vmatpush1.msra.mxu0 0.0
        %483 = vmatprep.subr.mxu0 0.0
        %484 = vmatpush1.msra.mxu0 0.0
        %485 = vmatprep.subr.mxu0 0.0
        %486 = vmatpush1.msra.mxu0 0.0
        %487 = vmatprep.subr.mxu0 0.0
        %488 = vmatpush1.msra.mxu0 0.0
        %489 = vmatprep.subr.mxu0 0.0
        %490 = vmatpush1.msra.mxu0 0.0
        %491 = vmatprep.subr.mxu0 0.0
        %492 = vmatpush1.msra.mxu0 0.0
        %493 = vmatprep.subr.mxu0 0.0
        %494 = vmatpush1.msra.mxu0 0.0
        %495 = vmatprep.subr.mxu0 0.0
        %496 = vmatpush1.msra.mxu0 0.0
        %497 = vmatprep.subr.mxu0 0.0
        %498 = vmatpush1.msra.mxu0 0.0
        %499 = vmatprep.mubr.f32.mxu0 0.0
        %500 = vmatmul.mubr.f32.gmra.mrb[0].mxu0 %v433
        %v501 = vpop.f32.mrb[0].mxu0
        %v502 = vadd.f32 %v430, %v501
        %v503 = vpop.f32.mrb[0].mxu0
        %504 = vdwg.mxu0
        %v505 = vxor.u32 %v502, 2147483648
        %v506 = vmul.f32 %v505, 1.442695
        %v507 = vpow.pop %v506
        %v508 = vadd.f32 %v507, 1.0
        %v509 = vrcp.pop %v508
        %v510 = vmul.f32 1.0, %v509
        %v511 = vlaneseq
        %v512 = vshrl.u32 %v511, 7
        %v513 = vsub.s32 0, %v512
        %v514 = vrot.slane %v510, %v513
        %516 = vbcast.lane.b32.xlu0 %v514, 256
        %v517 = vpop.permute.xlu0 %516
        %s519 = sor.u32 256, 8
        %520 = vbcast.lane.b32.xlu0 %v514, %s519
        %v521 = vpop.permute.xlu0 %520
        %s523 = sor.u32 256, 16
        %524 = vbcast.lane.b32.xlu0 %v514, %s523
        %v525 = vpop.permute.xlu0 %524
        %s527 = sor.u32 256, 24
        %528 = vbcast.lane.b32.xlu0 %v514, %s527
        %v529 = vpop.permute.xlu0 %528
        %s531 = sor.u32 256, 32
        %532 = vbcast.lane.b32.xlu0 %v514, %s531
        %v533 = vpop.permute.xlu0 %532
        %s535 = sor.u32 256, 40
        %536 = vbcast.lane.b32.xlu0 %v514, %s535
        %v537 = vpop.permute.xlu0 %536
        %s539 = sor.u32 256, 48
        %540 = vbcast.lane.b32.xlu0 %v514, %s539
        %v541 = vpop.permute.xlu0 %540
        %s543 = sor.u32 256, 56
        %544 = vbcast.lane.b32.xlu0 %v514, %s543
        %v545 = vpop.permute.xlu0 %544
        %v546 = vmul.f32 %v243, %v517
        %v547 = vmul.f32 %v244, %v517
        %v548 = vmul.f32 %v245, %v521
        %v549 = vmul.f32 %v246, %v521
        %v550 = vmul.f32 %v247, %v525
        %v551 = vmul.f32 %v248, %v525
        %v552 = vmul.f32 %v249, %v529
        %v553 = vmul.f32 %v250, %v529
        %v554 = vmul.f32 %v251, %v533
        %v555 = vmul.f32 %v252, %v533
        %v556 = vmul.f32 %v253, %v537
        %v557 = vmul.f32 %v254, %v537
        %v558 = vmul.f32 %v255, %v541
        %v559 = vmul.f32 %v256, %v541
        %v560 = vmul.f32 %v257, %v545
        %v561 = vmul.f32 %v258, %v545
        %562 = vst [vmem:[%s242] sm:$0xff] %v546
        %563 = vst [vmem:[%s242 + $0x8] sm:$0xff] %v547
        %564 = vst [vmem:[%s242 + $0x10] sm:$0xff] %v548
        %565 = vst [vmem:[%s242 + $0x18] sm:$0xff] %v549
        %566 = vst [vmem:[%s242 + $0x20] sm:$0xff] %v550
        %567 = vst [vmem:[%s242 + $0x28] sm:$0xff] %v551
        %568 = vst [vmem:[%s242 + $0x30] sm:$0xff] %v552
        %569 = vst [vmem:[%s242 + $0x38] sm:$0xff] %v553
        %570 = vst [vmem:[%s242 + $0x40] sm:$0xff] %v554
        %571 = vst [vmem:[%s242 + $0x48] sm:$0xff] %v555
        %572 = vst [vmem:[%s242 + $0x50] sm:$0xff] %v556
        %573 = vst [vmem:[%s242 + $0x58] sm:$0xff] %v557
        %574 = vst [vmem:[%s242 + $0x60] sm:$0xff] %v558
        %575 = vst [vmem:[%s242 + $0x68] sm:$0xff] %v559
        %576 = vst [vmem:[%s242 + $0x70] sm:$0xff] %v560
        %577 = vst [vmem:[%s242 + $0x78] sm:$0xff] %v561
        %s578 = sand.u32 %s140, 1
        %s579 = scalar_lea.sflag [#allocation4], %s578
        %s580 = sand.u32 %s140, 1
        %s581 = smul.addr %s580, 128
        %s582 = scalar_lea.vmem [#allocation5], %s581
        // Predicated region
        $region45: #{tpu_custom_call.1} parent=39 // pred_check
          %p583 = pneg %p150
        $region46: #{tpu_custom_call.1} parent=39 // pred_check_branch
          %585 = sbr.rel (%p583) target = $region48
        $region47: #{tpu_custom_call.1} parent=39 // pred_region
          %s587 = ssub.s32 2048, 2048
          %588 = vsyncadd %s579, %s587
          %s589 = smul.addr %s22, 16
          %s590 = smul.addr %s589, 128
          %s591 = scalar_lea.hbm %s5, %s590
          %s592 = sshll.u32 %s582, 4
          %s593 = int_to_ptr.vmem [resolvable:$true] %s592
          %598 = dma.vmem_to_hbm [thread:$0]  %s593, 2048, %s591, %s579, 256, 256, 16
        $region48: #{tpu_custom_call.1} parent=39 // pred_fallthru
          _
      $region40: #{tpu_custom_call.1} parent=5 // pred_fallthru
        _
      %p599 = scmp.le.s32.totalorder 2, %s17
      // Predicated region
      $region49: #{tpu_custom_call.1} parent=5 // pred_check
        %p600 = pneg %p599
      $region50: #{tpu_custom_call.1} parent=5 // pred_check_branch
        %602 = sbr.rel (%p600) target = $region52
      $region51: #{tpu_custom_call.1} parent=5 // pred_region
        %s603 = ssub.s32 %s17, 2
        // Predicated region
        $region53: #{tpu_custom_call.1} parent=51 // pred_check
          %p604 = pneg %p156
        $region54: #{tpu_custom_call.1} parent=51 // pred_check_branch
          %606 = sbr.rel (%p604) target = $region56
        $region55: #{tpu_custom_call.1} parent=51 // pred_region
          %s607 = sand.u32 %s141, 1
          %s608 = scalar_lea.sflag [#allocation4], %s607
          %s609 = sand.u32 %s141, 1
          %s610 = smul.addr %s609, 128
          %s611 = scalar_lea.vmem [#allocation5], %s610
          %612 = dma.done %s608, 2048
        $region56: #{tpu_custom_call.1} parent=51 // pred_fallthru
          _
      $region52: #{tpu_custom_call.1} parent=5 // pred_fallthru
        _
    $region6: #{tpu_custom_call.1} parent=1 // loop_footer
      %s21 = sadd.s32 1, %s17
    $region7: #{tpu_custom_call.1} parent=1 // loop_footer_branch
      %16 = sbr.rel target = $region3
    $region8: #{tpu_custom_call.1} parent=1 // loop_exit
      _
    %613 = vsyncpa [#allocation3], 1
    %s614 = scalar_lea.sflag [#allocation3], 1
    %615 = vsyncpa %s614, 1
    %616 = vsyncpa [#allocation4], 1
    %s617 = scalar_lea.sflag [#allocation4], 1
    %618 = vsyncpa %s617, 1

</llo_original>
